<compile_context>
chip_gen: v6e
topology: v6e:2x2x1
jax: 0.10.0
libtpu: 0.0.40
codegen_flags: <defaults>
</compile_context>

<pallas_src>
import jax
import jax.numpy as jnp
from jax.experimental import pallas as pl
from jax.experimental.pallas import tpu as pltpu


# ----------------------------------------------------------------------------
# so3 exponential map (Rodrigues formula) — tiny per-head param setup in plain
# JAX (glue), matching pytorch3d.so3_exponential_map semantics.
# ----------------------------------------------------------------------------
def _hat(v):
    # v: (H, 3) -> (H, 3, 3) skew-symmetric
    x, y, z = v[:, 0], v[:, 1], v[:, 2]
    zero = jnp.zeros_like(x)
    row0 = jnp.stack([zero, -z, y], axis=-1)
    row1 = jnp.stack([z, zero, -x], axis=-1)
    row2 = jnp.stack([-y, x, zero], axis=-1)
    return jnp.stack([row0, row1, row2], axis=-2)


def so3_exponential_map(log_rot, eps=1e-4):
    nrms = jnp.sum(log_rot * log_rot, axis=-1)
    rot_angles = jnp.sqrt(jnp.clip(nrms, eps))
    inv = 1.0 / rot_angles
    fac1 = inv * jnp.sin(rot_angles)
    fac2 = inv * inv * (1.0 - jnp.cos(rot_angles))
    K = _hat(log_rot)                                   # (H, 3, 3)
    KK = jnp.einsum("hij,hjk->hik", K, K)               # (H, 3, 3)
    eye = jnp.eye(3, dtype=log_rot.dtype)
    return fac1[:, None, None] * K + fac2[:, None, None] * KK + eye[None]


# ----------------------------------------------------------------------------
# Pallas kernel: out[n] = x0*r'[0,n] + x1*r'[1,n] + x2*r'[2,n] + bias[n]
# Per-head params come as 12 flat SMEM scalars (scalar prefetch):
#   params[h*12 + n*4 + 0..2] = R'[0..2, n],  params[h*12 + n*4 + 3] = bias[n]
# pcd_ref / out_ref blocks are (b_tile, 3, row_tile, 128).
# ----------------------------------------------------------------------------
def _vol_kernel(params_ref, pcd_ref, out_ref):
    h = pl.program_id(1)
    base = h * 12

    x0 = pcd_ref[:, 0]       # (b_tile, row_tile, 128)
    x1 = pcd_ref[:, 1]
    x2 = pcd_ref[:, 2]

    for n in range(3):       # static unroll, stays on the VPU (no MXU for 3x3)
        off = base + 4 * n
        out_ref[:, n] = (x0 * params_ref[off]
                         + x1 * params_ref[off + 1]
                         + x2 * params_ref[off + 2]
                         + params_ref[off + 3]).astype(out_ref.dtype)


# ----------------------------------------------------------------------------
# Per-generation block budget + tile selection.
# ----------------------------------------------------------------------------
def _block_budget_bytes():
    """Per-grid-step block size target, by TPU generation."""
    kind = ""
    try:
        kind = jax.devices()[0].device_kind.lower()
    except Exception:
        pass
    if "v5" in kind:
        # v5e: 16 MiB scoped-VMEM default; 1.5 MiB blocks already hide overhead
        # at ~820 GB/s.
        return (3 * 1024 * 1024) // 2
    if "7" in kind:
        # v7x: 3.2 TB/s per TC — bigger blocks to amortize ~0.35 us/step.
        return 4 * 1024 * 1024
    # v6e default: 1.5 MiB is at the knee of the measured tile-size curve.
    return (3 * 1024 * 1024) // 2


def _choose_tiles(B, rows, budget_bytes, itemsize):
    """Pick (b_tile, row_tile) so each block is ~budget_bytes.

    Last-two-dims constraint: row_tile is a multiple of 8 OR the full `rows`
    extent; b_tile is unconstrained (leading dim).  Ragged tails along either
    tiled axis are handled by a cdiv grid (Pallas masks the edge blocks).
    """
    bytes_per_row = 3 * 128 * itemsize           # one 128-lane row of all 3 coords
    max_rows = max(1, budget_bytes // bytes_per_row)
    if rows <= max_rows:
        row_tile = rows                          # full extent -> always legal
        bytes_per_batch = rows * bytes_per_row
        b_tile = int(max(1, min(B, budget_bytes // max(1, bytes_per_batch))))
    else:
        row_tile = int(max(8, (max_rows // 8) * 8))   # fixed MiB-scale tile
        b_tile = 1
    return b_tile, row_tile


# ----------------------------------------------------------------------------
# Wrapper.
# ----------------------------------------------------------------------------
def vol_transformer_forward(pcd, log_R, shift, scales=None, block_budget_bytes=None):
    """pcd: (B, H, 3, P) float32; log_R/shift/scales: (H, 3)."""
    B, H, C, P = pcd.shape
    assert C == 3
    # TODO(synk): ragged tail handling for P not a multiple of 128.
    assert P % 128 == 0, "P must be a multiple of 128"

    itemsize = jnp.dtype(pcd.dtype).itemsize
    rows = P // 128
    budget = block_budget_bytes if block_budget_bytes is not None else _block_budget_bytes()
    b_tile, row_tile = _choose_tiles(B, rows, budget, itemsize)
    block_bytes = b_tile * 3 * row_tile * 128 * itemsize

    # --- fold shift & scale into a scaled rotation + bias (wrapper-side, tiny)
    R = so3_exponential_map(log_R)                       # (H, 3, 3): R[h, c, n]
    scl = scales if scales is not None else jnp.ones((H, 3), dtype=pcd.dtype)
    r_scaled = R * scl[:, None, :]                       # scale acts on output coord n
    bias = jnp.einsum("hc,hcn->hn", shift, r_scaled)     # (H, 3)
    r_t = jnp.transpose(r_scaled, (0, 2, 1))             # (H, n, c)
    params = jnp.concatenate(
        [r_t, bias[:, :, None]], axis=-1).astype(jnp.float32)   # (H, 3, 4)
    params_flat = params.reshape(H * 12)                 # flat 1-D SMEM array

    # --- lane/sublane-dense view of the point axis
    pcd5 = pcd.reshape(B, H, 3, rows, 128)

    block = (b_tile, pl.Squeezed(), 3, row_tile, 128)
    spec = pl.BlockSpec(block, lambda b, h, t, prm: (b, h, 0, t, 0))

    grid = (pl.cdiv(B, b_tile), H, pl.cdiv(rows, row_tile))

    # in + out, double-buffered, plus headroom; capped well under physical VMEM.
    vmem_limit = int(min(64 * 1024 * 1024, 4 * block_bytes + 8 * 1024 * 1024))

    out5 = pl.pallas_call(
        _vol_kernel,
        out_shape=jax.ShapeDtypeStruct((B, H, 3, rows, 128), pcd.dtype),
        grid_spec=pltpu.PrefetchScalarGridSpec(
            num_scalar_prefetch=1,
            grid=grid,
            in_specs=[spec],
            out_specs=spec,
        ),
        compiler_params=pltpu.CompilerParams(
            dimension_semantics=("parallel", "parallel", "parallel"),
            vmem_limit_bytes=vmem_limit,
        ),
        cost_estimate=pl.CostEstimate(
            flops=6 * B * H * 3 * P,
            transcendentals=0,
            bytes_accessed=2 * B * H * 3 * P * itemsize,
        ),
    )(params_flat, pcd5)

    return out5.reshape(B, H, 3, P)


# ----------------------------------------------------------------------------
# Pure-JAX reference (mirrors the PyTorch forward) for a sanity check.
# ----------------------------------------------------------------------------
def vol_transformer_reference(pcd, log_R, shift, scales=None):
    x = pcd + shift[None, :, :, None]
    R = so3_exponential_map(log_R)
    out = jnp.einsum("bhcp,hcn->bhnp", x, R)
    if scales is not None:
        out = out * scales[None, :, :, None]
    return out


if __name__ == "__main__":
    key = jax.random.PRNGKey(0)
    B, H, P = 2, 4, 256

    k_pcd, k_logr, k_shift, k_scale = jax.random.split(key, 4)
    pcd = jax.random.normal(k_pcd, (B, H, 3, P), dtype=jnp.float32)

    # Parameter init matching the module's __init__ (randn / zeros / ones):
    log_R = jax.random.normal(k_logr, (H, 3), dtype=jnp.float32)
    shift = jnp.zeros((H, 3), dtype=jnp.float32)
    scales = jnp.ones((H, 3), dtype=jnp.float32)

    # Small-P path: rows fits the budget, batch axis folded into the block.
    out = vol_transformer_forward(pcd, log_R, shift, scales)
    out = jax.block_until_ready(out)
    ref = vol_transformer_reference(pcd, log_R, shift, scales)
    assert out.shape == (B, H, 3, P)
    assert jnp.allclose(out, ref, atol=1e-5, rtol=1e-5)

    # Folded shift/scale path with non-trivial params.
    shift2 = 0.5 * jax.random.normal(k_shift, (H, 3), dtype=jnp.float32)
    scales2 = 1.0 + 0.1 * jax.random.normal(k_scale, (H, 3), dtype=jnp.float32)
    out2 = jax.block_until_ready(vol_transformer_forward(pcd, log_R, shift2, scales2))
    ref2 = vol_transformer_reference(pcd, log_R, shift2, scales2)
    assert jnp.allclose(out2, ref2, atol=1e-4, rtol=1e-4)

    # No-scales variant (do_scales=False).
    out3 = jax.block_until_ready(vol_transformer_forward(pcd, log_R, shift2, None))
    ref3 = vol_transformer_reference(pcd, log_R, shift2, None)
    assert jnp.allclose(out3, ref3, atol=1e-4, rtol=1e-4)

    # Row-tiled + ragged-tail path: force a tiny block budget so rows=10 is
    # split into row_tile=8 blocks with a masked tail block (cdiv grid).
    P2 = 128 * 10
    pcd_big = jax.random.normal(k_pcd, (B, 2, 3, P2), dtype=jnp.float32)
    log_R2 = jax.random.normal(k_logr, (2, 3), dtype=jnp.float32)
    shift3 = 0.3 * jax.random.normal(k_shift, (2, 3), dtype=jnp.float32)
    out4 = jax.block_until_ready(
        vol_transformer_forward(pcd_big, log_R2, shift3, None,
                                block_budget_bytes=8 * 3 * 128 * 4))
    ref4 = vol_transformer_reference(pcd_big, log_R2, shift3, None)
    assert jnp.allclose(out4, ref4, atol=1e-4, rtol=1e-4)

    print("KERNEL_OK")
</pallas_src>

<mosaic_0001>
module attributes {stable_mosaic.version = 11 : i64} {
  func.func @_vol_kernel(%arg0: i32, %arg1: i32, %arg2: i32, %arg3: memref<48xf32, #tpu.memory_space<smem>>, %arg4: memref<2x1x3x2x128xf32, #tpu.memory_space<vmem>>, %arg5: memref<2x1x3x2x128xf32, #tpu.memory_space<vmem>>) attributes {dimension_semantics = [#tpu.dimension_semantics<parallel>, #tpu.dimension_semantics<parallel>, #tpu.dimension_semantics<parallel>], iteration_bounds = array<i64: 1, 4, 1>, scalar_prefetch = 1 : i64, scratch_operands = 0 : i64, tpu.core_type = #tpu.core_type<tc>, window_params = [{transform_indices = @transform_0, window_bounds = array<i64: 2, 1, 3, 2, 128>}, {transform_indices = @transform_1, window_bounds = array<i64: 2, 1, 3, 2, 128>}]} {
    %c12_i32 = arith.constant 12 : i32
    %0 = arith.muli %arg1, %c12_i32 : i32
    %c0 = arith.constant 0 : index
    %c0_0 = arith.constant 0 : index
    %c0_1 = arith.constant 0 : index
    %c0_2 = arith.constant 0 : index
    %c0_3 = arith.constant 0 : index
    %1 = vector.load %arg4[%c0, %c0_0, %c0_1, %c0_2, %c0_3] : memref<2x1x3x2x128xf32, #tpu.memory_space<vmem>>, vector<2x1x1x2x128xf32>
    %2 = vector.shape_cast %1 : vector<2x1x1x2x128xf32> to vector<2x2x128xf32>
    %c0_4 = arith.constant 0 : index
    %c0_5 = arith.constant 0 : index
    %c1 = arith.constant 1 : index
    %c0_6 = arith.constant 0 : index
    %c0_7 = arith.constant 0 : index
    %3 = vector.load %arg4[%c0_4, %c0_5, %c1, %c0_6, %c0_7] : memref<2x1x3x2x128xf32, #tpu.memory_space<vmem>>, vector<2x1x1x2x128xf32>
    %4 = vector.shape_cast %3 : vector<2x1x1x2x128xf32> to vector<2x2x128xf32>
    %c0_8 = arith.constant 0 : index
    %c0_9 = arith.constant 0 : index
    %c2 = arith.constant 2 : index
    %c0_10 = arith.constant 0 : index
    %c0_11 = arith.constant 0 : index
    %5 = vector.load %arg4[%c0_8, %c0_9, %c2, %c0_10, %c0_11] : memref<2x1x3x2x128xf32, #tpu.memory_space<vmem>>, vector<2x1x1x2x128xf32>
    %6 = vector.shape_cast %5 : vector<2x1x1x2x128xf32> to vector<2x2x128xf32>
    %c0_i32 = arith.constant 0 : i32
    %7 = arith.addi %0, %c0_i32 : i32
    %8 = arith.index_cast %7 : i32 to index
    %9 = memref.load %arg3[%8] : memref<48xf32, #tpu.memory_space<smem>>
    %10 = vector.broadcast %9 : f32 to vector<2x2x128xf32>
    %11 = arith.mulf %2, %10 : vector<2x2x128xf32>
    %c1_i32 = arith.constant 1 : i32
    %12 = arith.addi %7, %c1_i32 : i32
    %13 = arith.index_cast %12 : i32 to index
    %14 = memref.load %arg3[%13] : memref<48xf32, #tpu.memory_space<smem>>
    %15 = vector.broadcast %14 : f32 to vector<2x2x128xf32>
    %16 = arith.mulf %4, %15 : vector<2x2x128xf32>
    %17 = arith.addf %11, %16 : vector<2x2x128xf32>
    %c2_i32 = arith.constant 2 : i32
    %18 = arith.addi %7, %c2_i32 : i32
    %19 = arith.index_cast %18 : i32 to index
    %20 = memref.load %arg3[%19] : memref<48xf32, #tpu.memory_space<smem>>
    %21 = vector.broadcast %20 : f32 to vector<2x2x128xf32>
    %22 = arith.mulf %6, %21 : vector<2x2x128xf32>
    %23 = arith.addf %17, %22 : vector<2x2x128xf32>
    %c3_i32 = arith.constant 3 : i32
    %24 = arith.addi %7, %c3_i32 : i32
    %25 = arith.index_cast %24 : i32 to index
    %26 = memref.load %arg3[%25] : memref<48xf32, #tpu.memory_space<smem>>
    %27 = vector.broadcast %26 : f32 to vector<2x2x128xf32>
    %28 = arith.addf %23, %27 : vector<2x2x128xf32>
    %c0_12 = arith.constant 0 : index
    %c0_13 = arith.constant 0 : index
    %c0_14 = arith.constant 0 : index
    %c0_15 = arith.constant 0 : index
    %c0_16 = arith.constant 0 : index
    %29 = vector.load %arg5[%c0_12, %c0_13, %c0_14, %c0_15, %c0_16] : memref<2x1x3x2x128xf32, #tpu.memory_space<vmem>>, vector<2x1x1x2x128xf32>
    %30 = vector.shape_cast %29 : vector<2x1x1x2x128xf32> to vector<2x2x128xf32>
    %31 = vector.shape_cast %28 : vector<2x2x128xf32> to vector<2x1x1x2x128xf32>
    tpu.vector_store %arg5[%c0_12, %c0_13, %c0_14, %c0_15, %c0_16], %31 {strides = array<i32>} : memref<2x1x3x2x128xf32, #tpu.memory_space<vmem>>, vector<2x1x1x2x128xf32>,
    %c4_i32 = arith.constant 4 : i32
    %32 = arith.addi %0, %c4_i32 : i32
    %33 = arith.index_cast %32 : i32 to index
    %34 = memref.load %arg3[%33] : memref<48xf32, #tpu.memory_space<smem>>
    %35 = vector.broadcast %34 : f32 to vector<2x2x128xf32>
    %36 = arith.mulf %2, %35 : vector<2x2x128xf32>
    %c1_i32_17 = arith.constant 1 : i32
    %37 = arith.addi %32, %c1_i32_17 : i32
    %38 = arith.index_cast %37 : i32 to index
    %39 = memref.load %arg3[%38] : memref<48xf32, #tpu.memory_space<smem>>
    %40 = vector.broadcast %39 : f32 to vector<2x2x128xf32>
    %41 = arith.mulf %4, %40 : vector<2x2x128xf32>
    %42 = arith.addf %36, %41 : vector<2x2x128xf32>
    %c2_i32_18 = arith.constant 2 : i32
    %43 = arith.addi %32, %c2_i32_18 : i32
    %44 = arith.index_cast %43 : i32 to index
    %45 = memref.load %arg3[%44] : memref<48xf32, #tpu.memory_space<smem>>
    %46 = vector.broadcast %45 : f32 to vector<2x2x128xf32>
    %47 = arith.mulf %6, %46 : vector<2x2x128xf32>
    %48 = arith.addf %42, %47 : vector<2x2x128xf32>
    %c3_i32_19 = arith.constant 3 : i32
    %49 = arith.addi %32, %c3_i32_19 : i32
    %50 = arith.index_cast %49 : i32 to index
    %51 = memref.load %arg3[%50] : memref<48xf32, #tpu.memory_space<smem>>
    %52 = vector.broadcast %51 : f32 to vector<2x2x128xf32>
    %53 = arith.addf %48, %52 : vector<2x2x128xf32>
    %c0_20 = arith.constant 0 : index
    %c0_21 = arith.constant 0 : index
    %c1_22 = arith.constant 1 : index
    %c0_23 = arith.constant 0 : index
    %c0_24 = arith.constant 0 : index
    %54 = vector.load %arg5[%c0_20, %c0_21, %c1_22, %c0_23, %c0_24] : memref<2x1x3x2x128xf32, #tpu.memory_space<vmem>>, vector<2x1x1x2x128xf32>
    %55 = vector.shape_cast %54 : vector<2x1x1x2x128xf32> to vector<2x2x128xf32>
    %56 = vector.shape_cast %53 : vector<2x2x128xf32> to vector<2x1x1x2x128xf32>
    tpu.vector_store %arg5[%c0_20, %c0_21, %c1_22, %c0_23, %c0_24], %56 {strides = array<i32>} : memref<2x1x3x2x128xf32, #tpu.memory_space<vmem>>, vector<2x1x1x2x128xf32>,
    %c8_i32 = arith.constant 8 : i32
    %57 = arith.addi %0, %c8_i32 : i32
    %58 = arith.index_cast %57 : i32 to index
    %59 = memref.load %arg3[%58] : memref<48xf32, #tpu.memory_space<smem>>
    %60 = vector.broadcast %59 : f32 to vector<2x2x128xf32>
    %61 = arith.mulf %2, %60 : vector<2x2x128xf32>
    %c1_i32_25 = arith.constant 1 : i32
    %62 = arith.addi %57, %c1_i32_25 : i32
    %63 = arith.index_cast %62 : i32 to index
    %64 = memref.load %arg3[%63] : memref<48xf32, #tpu.memory_space<smem>>
    %65 = vector.broadcast %64 : f32 to vector<2x2x128xf32>
    %66 = arith.mulf %4, %65 : vector<2x2x128xf32>
    %67 = arith.addf %61, %66 : vector<2x2x128xf32>
    %c2_i32_26 = arith.constant 2 : i32
    %68 = arith.addi %57, %c2_i32_26 : i32
    %69 = arith.index_cast %68 : i32 to index
    %70 = memref.load %arg3[%69] : memref<48xf32, #tpu.memory_space<smem>>
    %71 = vector.broadcast %70 : f32 to vector<2x2x128xf32>
    %72 = arith.mulf %6, %71 : vector<2x2x128xf32>
    %73 = arith.addf %67, %72 : vector<2x2x128xf32>
    %c3_i32_27 = arith.constant 3 : i32
    %74 = arith.addi %57, %c3_i32_27 : i32
    %75 = arith.index_cast %74 : i32 to index
    %76 = memref.load %arg3[%75] : memref<48xf32, #tpu.memory_space<smem>>
    %77 = vector.broadcast %76 : f32 to vector<2x2x128xf32>
    %78 = arith.addf %73, %77 : vector<2x2x128xf32>
    %c0_28 = arith.constant 0 : index
    %c0_29 = arith.constant 0 : index
    %c2_30 = arith.constant 2 : index
    %c0_31 = arith.constant 0 : index
    %c0_32 = arith.constant 0 : index
    %79 = vector.load %arg5[%c0_28, %c0_29, %c2_30, %c0_31, %c0_32] : memref<2x1x3x2x128xf32, #tpu.memory_space<vmem>>, vector<2x1x1x2x128xf32>
    %80 = vector.shape_cast %79 : vector<2x1x1x2x128xf32> to vector<2x2x128xf32>
    %81 = vector.shape_cast %78 : vector<2x2x128xf32> to vector<2x1x1x2x128xf32>
    tpu.vector_store %arg5[%c0_28, %c0_29, %c2_30, %c0_31, %c0_32], %81 {strides = array<i32>} : memref<2x1x3x2x128xf32, #tpu.memory_space<vmem>>, vector<2x1x1x2x128xf32>,
    return
  }
  func.func @transform_0(%arg0: i32, %arg1: i32, %arg2: i32, %arg3: memref<48xf32, #tpu.memory_space<smem>>) -> (i32, i32, i32, i32, i32) {
    %c0_i32 = arith.constant 0 : i32
    %c0_i32_0 = arith.constant 0 : i32
    %c0_i32_1 = arith.constant 0 : i32
    return %arg0, %arg1, %c0_i32, %arg2, %c0_i32_0 : i32, i32, i32, i32, i32
  }
  func.func @transform_1(%arg0: i32, %arg1: i32, %arg2: i32, %arg3: memref<48xf32, #tpu.memory_space<smem>>) -> (i32, i32, i32, i32, i32) {
    %c0_i32 = arith.constant 0 : i32
    %c0_i32_0 = arith.constant 0 : i32
    %c0_i32_1 = arith.constant 0 : i32
    return %arg0, %arg1, %c0_i32, %arg2, %c0_i32_0 : i32, i32, i32, i32, i32
  }
}

</mosaic_0001>

<llo_original>
// kernel: tpu_custom_call.1
$region0: #{tpu_custom_call.1}
  #allocation0 [shape = 'u32[]', space=smem, size = 0x4, offset = 0x4, fixed_abs, tag = 'smem constant byte address 0x4 - core index']
  #allocation1 [shape = 'u32[144,128]{1,0:T(1,128)}', space=vmem, size = 0x12000, scoped, tag = 'internal scratch']
  #allocation2 [shape = 's32[1]{0}', space=sflag, size = 0x4, scoped, tag = 'scoped memory for tpu_custom_call.1']
  #allocation3 [shape = 'u8[512]{0}', space=smem, size = 0x200, scoped, tag = 'prefetched SMEM operand 0']
  #allocation8 [shape = 's32[]', space=sflag, size = 0x4, offset = 0, fixed_abs, tag = 'sflag constant byte address 0x0 - dummy sync flag']
  #allocation10 [shape = 's32[]', space=sflag, size = 0x4, offset = 0, fixed_abs, tag = 'sflag constant byte address 0x0 - dummy sync flag']
  %s0 = inlined_call_operand.hbm [shape: f32[48], index: 0, kind: input, shape index: {}]
  %s1 = inlined_call_operand.hbm [shape: f32[2,4,3,2,128], index: 1, kind: input, shape index: {}]
  %s2 = inlined_call_operand.hbm [shape: f32[2,4,3,2,128], index: 2, kind: output, shape index: {}]
  %s3 = sld [smem:[#allocation0]]
  $region41: #{tpu_custom_call.1} parent=0
    _
  %s5 = ssub.s32 1, %s3
  %s6 = scalar_select 0, %s5, %s3
  %8 = dma.hbm_to_smem %s0, 16, [#allocation3], [#allocation2]
  %9 = dma.done [#allocation2], 16
  %10 = sfence
  $region1: #{tpu_custom_call.1} parent=0
    #allocation4 [shape = 'u8[12288]{0}', space=vmem, size = 0x3000, scoped, tag = 'input window, operand 1']
    #allocation5 [shape = 's32[2]{0}', space=sflag, size = 0x8, scoped, tag = 'scoped memory for tpu_custom_call.1']
    #allocation6 [shape = 's32[2]{0}', space=sflag, size = 0x8, scoped, tag = 'scoped memory for tpu_custom_call.1']
    #allocation7 [shape = 'u8[12288]{0}', space=vmem, size = 0x3000, scoped, tag = 'output window, operand 0']
    %11 = vsyncpa [#allocation5], 0
    %s12 = scalar_lea.sflag [#allocation5], 1
    %13 = vsyncpa %s12, 0
    %14 = vsyncpa [#allocation6], 0
    %s15 = scalar_lea.sflag [#allocation6], 1
    %16 = vsyncpa %s15, 0
    loop: start=0, step=1, limit=6
    $region2: #{tpu_custom_call.1} parent=1 // loop_pre_header
      _
    $region3: #{tpu_custom_call.1} parent=1 // loop_header
      %s18 = sphi 0, %s22
      %p19 = scmp.ge.s32.totalorder %s18, 6
      %s25 = sphi 0, %s44
      %s26 = sphi 0, %s40
      %s27 = sphi 0, %s36
      %s28 = sphi 0, %s25
      %s29 = sphi 0, %s26
      %s30 = sphi 0, %s27
      %s31 = sphi 0, %s28
      %s32 = sphi 0, %s29
      %s33 = sphi 0, %s30
      %s51 = sphi 0, %s53
      %s54 = sphi 0, %s51
      %s55 = sphi 0, %s54
      %s71 = sphi 0, %s55
      %s81 = sphi 0, %s83
      %s84 = sphi 0, %s81
      %s85 = sphi 0, %s84
      %s101 = sphi 0, %s85
    $region4: #{tpu_custom_call.1} parent=1 // loop_header_branch
      %21 = sbr.rel (%p19) target = $region8
    $region5: #{tpu_custom_call.1} parent=1 // loop_body
      %s23 = ssub.s32 %s18, 1
      %s24 = ssub.s32 %s18, 2
      %s34 = sadd.s32 1, %s27
      %p35 = scmp.ge.s32.totalorder %s34, 1
      %s36 = scalar_select %p35, 0, %s34
      %s37 = sadd.s32 1, %s26
      %s38 = scalar_select %p35, %s37, %s26
      %p39 = scmp.ge.s32.totalorder %s38, 4
      %s40 = scalar_select %p39, 0, %s38
      %s41 = sadd.s32 1, %s25
      %s42 = scalar_select %p39, %s41, %s25
      %p43 = scmp.ge.s32.totalorder %s42, 1
      %s44 = scalar_select %p43, 0, %s42
      %s45 = ssub.s32 %s25, %s44
      %s46 = ssub.s32 %s26, %s40
      %s47 = sor.u32 %s45, %s46
      %s48 = ssub.s32 %s27, %s36
      %s49 = sor.u32 %s47, %s48
      %p50 = scmp.eq.s32.totalorder %s49, 0
      %s52 = sadd.s32 %s51, 1
      %s53 = scalar_select %p50, %s51, %s52
      %p56 = pneg %p50
      %p57 = scmp.eq.s32.totalorder %s18, 3
      %p58 = por %p56, %p57
      %p59 = scmp.ne.s32.totalorder %s51, %s54
      %p60 = scmp.eq.s32.totalorder %s18, 0
      %p61 = por %p59, %p60
      %p62 = scmp.ne.s32.totalorder %s51, %s54
      %p63 = scmp.eq.s32.totalorder %s23, 3
      %p64 = por %p62, %p63
      %p65 = scmp.ne.s32.totalorder %s54, %s55
      %p66 = scmp.eq.s32.totalorder %s23, 0
      %p67 = por %p65, %p66
      %p68 = scmp.ne.s32.totalorder %s54, %s55
      %p69 = scmp.eq.s32.totalorder %s24, 3
      %p70 = por %p68, %p69
      %p72 = scmp.ne.s32.totalorder %s55, %s71
      %p73 = scmp.eq.s32.totalorder %s24, 0
      %p74 = por %p72, %p73
      %s75 = ssub.s32 %s25, %s44
      %s76 = ssub.s32 %s26, %s40
      %s77 = sor.u32 %s75, %s76
      %s78 = ssub.s32 %s27, %s36
      %s79 = sor.u32 %s77, %s78
      %p80 = scmp.eq.s32.totalorder %s79, 0
      %s82 = sadd.s32 %s81, 1
      %s83 = scalar_select %p80, %s81, %s82
      %p86 = pneg %p80
      %p87 = scmp.eq.s32.totalorder %s18, 3
      %p88 = por %p86, %p87
      %p89 = scmp.ne.s32.totalorder %s81, %s84
      %p90 = scmp.eq.s32.totalorder %s18, 0
      %p91 = por %p89, %p90
      %p92 = scmp.ne.s32.totalorder %s81, %s84
      %p93 = scmp.eq.s32.totalorder %s23, 3
      %p94 = por %p92, %p93
      %p95 = scmp.ne.s32.totalorder %s84, %s85
      %p96 = scmp.eq.s32.totalorder %s23, 0
      %p97 = por %p95, %p96
      %p98 = scmp.ne.s32.totalorder %s84, %s85
      %p99 = scmp.eq.s32.totalorder %s24, 3
      %p100 = por %p98, %p99
      %p102 = scmp.ne.s32.totalorder %s85, %s101
      %p103 = scmp.eq.s32.totalorder %s24, 0
      %p104 = por %p102, %p103
      %p105 = scmp.le.s32.totalorder 1, %s18
      %p106 = scmp.lt.s32.totalorder %s18, 5
      %p107 = pnand %p105, %p106
      %p108 = pneg %p107
      // Predicated region
      $region9: #{tpu_custom_call.1} parent=5 // pred_check
        _
      $region10: #{tpu_custom_call.1} parent=5 // pred_check_branch
        %110 = sbr.rel (%p107) target = $region12
      $region11: #{tpu_custom_call.1} parent=5 // pred_region
        %s111 = ssub.s32 %s18, 1
      $region12: #{tpu_custom_call.1} parent=5 // pred_fallthru
        _
      %p112 = scmp.lt.s32.totalorder %s18, 4
      // Predicated region
      $region13: #{tpu_custom_call.1} parent=5 // pred_check
        %p113 = pneg %p112
      $region14: #{tpu_custom_call.1} parent=5 // pred_check_branch
        %115 = sbr.rel (%p113) target = $region16
      $region15: #{tpu_custom_call.1} parent=5 // pred_region
        // Predicated region
        $region17: #{tpu_custom_call.1} parent=15 // pred_check
          %p116 = pneg %p61
        $region18: #{tpu_custom_call.1} parent=15 // pred_check_branch
          %118 = sbr.rel (%p116) target = $region20
        $region19: #{tpu_custom_call.1} parent=15 // pred_region
          #allocation9 [shape = 'u32[6]{0}', space=smem, size = 0x18, scoped, tag = 'DMA stride descriptor']
          %s119 = sand.u32 %s51, 1
          %s120 = scalar_lea.sflag [#allocation5], %s119
          %s121 = sand.u32 %s51, 1
          %s122 = smul.addr %s121, 12
          %s123 = scalar_lea.vmem [#allocation4], %s122
          %s124 = smul.u32 2, %s25
          %s126 = ssub.s32 192, 192
          %127 = vsyncadd %s120, %s126
          %s128 = smul.addr %s26, 3
          %s129 = sadd.s32 %s27, %s128
          %s130 = smul.addr %s124, 12
          %s131 = sadd.s32 %s129, %s130
          %s132 = smul.addr %s131, 32
          %s133 = scalar_lea.hbm %s1, %s132
          %s135 = sshll.u32 1, 14
          %s136 = sxor.u32 4294967295, %s135
          %s138 = sld [smem:[#allocation0]]
          %s139 = sadd.s32 2, %s138
          %s141 = sshll.u32 7, 26
          %s142 = sxor.u32 4294967295, %s141
          %s143 = sand.u32 0, %s142
          %s144 = sshll.u32 %s139, 26
          %s145 = sor.u32 %s143, %s144
          %s146 = sshll.u32 %s123, 4
          %s147 = int_to_ptr.vmem [resolvable:$true] %s146
          %153 = sst [smem:[#allocation9]] 384
          %s154 = scalar_lea.smem [#allocation9], 1
          %155 = sst [smem:[%s154]] 96
          %s156 = scalar_lea.smem [#allocation9], 2
          %157 = sst [smem:[%s156]] 3
          %s158 = scalar_lea.smem [#allocation9], 3
          %159 = sst [smem:[%s158]] 32
          %s160 = scalar_lea.smem [#allocation9], 4
          %161 = sst [smem:[%s160]] 32
          %s162 = scalar_lea.smem [#allocation9], 5
          %163 = sst [smem:[%s162]] 2
          %165 = dma.general %s133, 192, %s147, %s120, 131072, [#allocation9], %s145, 0
        $region20: #{tpu_custom_call.1} parent=15 // pred_fallthru
          _
      $region16: #{tpu_custom_call.1} parent=5 // pred_fallthru
        _
      %p166 = scmp.le.s32.totalorder 1, %s18
      %p167 = scmp.lt.s32.totalorder %s18, 5
      %p168 = pnand %p166, %p167
      %p169 = pneg %p168
      // Predicated region
      $region21: #{tpu_custom_call.1} parent=5 // pred_check
        _
      $region22: #{tpu_custom_call.1} parent=5 // pred_check_branch
        %171 = sbr.rel (%p168) target = $region24
      $region23: #{tpu_custom_call.1} parent=5 // pred_region
        %s172 = ssub.s32 %s18, 1
        %s173 = sand.u32 %s54, 1
        %s174 = scalar_lea.sflag [#allocation5], %s173
        %s175 = sand.u32 %s54, 1
        %s176 = smul.addr %s175, 12
        %s177 = scalar_lea.vmem [#allocation4], %s176
        // Predicated region
        $region25: #{tpu_custom_call.1} parent=23 // pred_check
          %p178 = pneg %p67
        $region26: #{tpu_custom_call.1} parent=23 // pred_check_branch
          %180 = sbr.rel (%p178) target = $region28
        $region27: #{tpu_custom_call.1} parent=23 // pred_region
          %181 = dma.done %s174, 192
        $region28: #{tpu_custom_call.1} parent=23 // pred_fallthru
          _
        %s182 = sand.u32 %s54, 1
        %s183 = scalar_lea.sflag [#allocation5], %s182
        %s184 = sand.u32 %s54, 1
        %s185 = smul.addr %s184, 12
        %s186 = scalar_lea.vmem [#allocation4], %s185
        %p187 = pneg %p67
        %p188 = pneg %p64
        %p189 = pneg %p97
        %p190 = pneg %p94
        %s191 = sand.u32 %s84, 1
        %s192 = scalar_lea.sflag [#allocation6], %s191
        %s193 = sand.u32 %s84, 1
        %s194 = smul.addr %s193, 12
        %s195 = scalar_lea.vmem [#allocation7], %s194
        %s196 = smul.u32 2, %s28
        %s197 = smul.u32 2, %s28
        %s198 = smul.u32 %s29, 12
        %v199 = vld [vmem:[%s177] sm:$0x3]
        %v200 = vld [vmem:[%s177 + $0x6] sm:$0x3]
        %s201 = scalar_lea.vmem %s177, 2 [#allocation4]
        %v202 = vld [vmem:[%s201] sm:$0x3]
        %v203 = vld [vmem:[%s201 + $0x6] sm:$0x3]
        %s204 = scalar_lea.vmem %s177, 4 [#allocation4]
        %v205 = vld [vmem:[%s204] sm:$0x3]
        %v206 = vld [vmem:[%s204 + $0x6] sm:$0x3]
        %s207 = sld [smem:[#allocation3 + %s198]]
        %v208 = vstv %s207
        %v209 = vmul.f32 %v199, %v208
        %v210 = vmul.f32 %v200, %v208
        %s211 = sadd.s32 %s198, 1
        %s212 = sld [smem:[#allocation3 + %s211]]
        %v213 = vstv %s212
        %v214 = vmul.f32 %v202, %v213
        %v215 = vmul.f32 %v203, %v213
        %v216 = vadd.f32 %v209, %v214
        %v217 = vadd.f32 %v210, %v215
        %s218 = sadd.s32 %s198, 2
        %s219 = sld [smem:[#allocation3 + %s218]]
        %v220 = vstv %s219
        %v221 = vmul.f32 %v205, %v220
        %v222 = vmul.f32 %v206, %v220
        %v223 = vadd.f32 %v216, %v221
        %v224 = vadd.f32 %v217, %v222
        %s225 = sadd.s32 %s198, 3
        %s226 = sld [smem:[#allocation3 + %s225]]
        %v227 = vstv %s226
        %v228 = vadd.f32 %v223, %v227
        %v229 = vadd.f32 %v224, %v227
        %230 = vst [vmem:[%s195] sm:$0x3] %v228
        %231 = vst [vmem:[%s195 + $0x6] sm:$0x3] %v229
        %s232 = sadd.s32 %s198, 4
        %s233 = sld [smem:[#allocation3 + %s232]]
        %v234 = vstv %s233
        %v235 = vmul.f32 %v199, %v234
        %v236 = vmul.f32 %v200, %v234
        %s237 = sadd.s32 %s198, 5
        %s238 = sld [smem:[#allocation3 + %s237]]
        %v239 = vstv %s238
        %v240 = vmul.f32 %v202, %v239
        %v241 = vmul.f32 %v203, %v239
        %v242 = vadd.f32 %v235, %v240
        %v243 = vadd.f32 %v236, %v241
        %s244 = sadd.s32 %s198, 6
        %s245 = sld [smem:[#allocation3 + %s244]]
        %v246 = vstv %s245
        %v247 = vmul.f32 %v205, %v246
        %v248 = vmul.f32 %v206, %v246
        %v249 = vadd.f32 %v242, %v247
        %v250 = vadd.f32 %v243, %v248
        %s251 = sadd.s32 %s198, 7
        %s252 = sld [smem:[#allocation3 + %s251]]
        %v253 = vstv %s252
        %v254 = vadd.f32 %v249, %v253
        %v255 = vadd.f32 %v250, %v253
        %s256 = scalar_lea.vmem %s195, 2 [#allocation7]
        %257 = vst [vmem:[%s256] sm:$0x3] %v254
        %258 = vst [vmem:[%s256 + $0x6] sm:$0x3] %v255
        %s259 = sadd.s32 %s198, 8
        %s260 = sld [smem:[#allocation3 + %s259]]
        %v261 = vstv %s260
        %v262 = vmul.f32 %v199, %v261
        %v263 = vmul.f32 %v200, %v261
        %s264 = sadd.s32 %s198, 9
        %s265 = sld [smem:[#allocation3 + %s264]]
        %v266 = vstv %s265
        %v267 = vmul.f32 %v202, %v266
        %v268 = vmul.f32 %v203, %v266
        %v269 = vadd.f32 %v262, %v267
        %v270 = vadd.f32 %v263, %v268
        %s271 = sadd.s32 %s198, 10
        %s272 = sld [smem:[#allocation3 + %s271]]
        %v273 = vstv %s272
        %v274 = vmul.f32 %v205, %v273
        %v275 = vmul.f32 %v206, %v273
        %v276 = vadd.f32 %v269, %v274
        %v277 = vadd.f32 %v270, %v275
        %s278 = sadd.s32 %s198, 11
        %s279 = sld [smem:[#allocation3 + %s278]]
        %v280 = vstv %s279
        %v281 = vadd.f32 %v276, %v280
        %v282 = vadd.f32 %v277, %v280
        %s283 = scalar_lea.vmem %s195, 4 [#allocation7]
        %284 = vst [vmem:[%s283] sm:$0x3] %v281
        %285 = vst [vmem:[%s283 + $0x6] sm:$0x3] %v282
        %s286 = sand.u32 %s84, 1
        %s287 = scalar_lea.sflag [#allocation6], %s286
        %s288 = sand.u32 %s84, 1
        %s289 = smul.addr %s288, 12
        %s290 = scalar_lea.vmem [#allocation7], %s289
        // Predicated region
        $region29: #{tpu_custom_call.1} parent=23 // pred_check
          %p291 = pneg %p94
        $region30: #{tpu_custom_call.1} parent=23 // pred_check_branch
          %293 = sbr.rel (%p291) target = $region32
        $region31: #{tpu_custom_call.1} parent=23 // pred_region
          #allocation11 [shape = 'u32[6]{0}', space=smem, size = 0x18, scoped, tag = 'DMA stride descriptor']
          %s294 = smul.u32 2, %s28
          %s296 = ssub.s32 192, 192
          %297 = vsyncadd %s287, %s296
          %s298 = smul.addr %s29, 3
          %s299 = sadd.s32 %s30, %s298
          %s300 = smul.addr %s294, 12
          %s301 = sadd.s32 %s299, %s300
          %s302 = smul.addr %s301, 32
          %s303 = scalar_lea.hbm %s2, %s302
          %s305 = sshll.u32 1, 14
          %s306 = sxor.u32 4294967295, %s305
          %s309 = sshll.u32 7, 18
          %s310 = sxor.u32 4294967295, %s309
          %s311 = sand.u32 0, %s310
          %s313 = sor.u32 %s311, 0
          %s314 = sshll.u32 %s290, 4
          %s315 = int_to_ptr.vmem [resolvable:$true] %s314
          %321 = sst [smem:[#allocation11]] 96
          %s322 = scalar_lea.smem [#allocation11], 1
          %323 = sst [smem:[%s322]] 384
          %s324 = scalar_lea.smem [#allocation11], 2
          %325 = sst [smem:[%s324]] 3
          %s326 = scalar_lea.smem [#allocation11], 3
          %327 = sst [smem:[%s326]] 32
          %s328 = scalar_lea.smem [#allocation11], 4
          %329 = sst [smem:[%s328]] 32
          %s330 = scalar_lea.smem [#allocation11], 5
          %331 = sst [smem:[%s330]] 2
          %333 = dma.general %s315, 192, %s303, %s287, 131072, [#allocation11], %s313, 0
        $region32: #{tpu_custom_call.1} parent=23 // pred_fallthru
          _
      $region24: #{tpu_custom_call.1} parent=5 // pred_fallthru
        _
      %p334 = scmp.le.s32.totalorder 2, %s18
      // Predicated region
      $region33: #{tpu_custom_call.1} parent=5 // pred_check
        %p335 = pneg %p334
      $region34: #{tpu_custom_call.1} parent=5 // pred_check_branch
        %337 = sbr.rel (%p335) target = $region36
      $region35: #{tpu_custom_call.1} parent=5 // pred_region
        %s338 = ssub.s32 %s18, 2
        // Predicated region
        $region37: #{tpu_custom_call.1} parent=35 // pred_check
          %p339 = pneg %p100
        $region38: #{tpu_custom_call.1} parent=35 // pred_check_branch
          %341 = sbr.rel (%p339) target = $region40
        $region39: #{tpu_custom_call.1} parent=35 // pred_region
          %s342 = sand.u32 %s85, 1
          %s343 = scalar_lea.sflag [#allocation6], %s342
          %s344 = sand.u32 %s85, 1
          %s345 = smul.addr %s344, 12
          %s346 = scalar_lea.vmem [#allocation7], %s345
          %347 = dma.done %s343, 192
        $region40: #{tpu_custom_call.1} parent=35 // pred_fallthru
          _
      $region36: #{tpu_custom_call.1} parent=5 // pred_fallthru
        _
    $region6: #{tpu_custom_call.1} parent=1 // loop_footer
      %s22 = sadd.s32 1, %s18
    $region7: #{tpu_custom_call.1} parent=1 // loop_footer_branch
      %17 = sbr.rel target = $region3
    $region8: #{tpu_custom_call.1} parent=1 // loop_exit
      _
    %348 = vsyncpa [#allocation5], 1
    %s349 = scalar_lea.sflag [#allocation5], 1
    %350 = vsyncpa %s349, 1
    %351 = vsyncpa [#allocation6], 1
    %s352 = scalar_lea.sflag [#allocation6], 1
    %353 = vsyncpa %s352, 1

</llo_original>
